<compile_context>
chip_gen: v5e
topology: v5e:2x2
jax: 0.10.0
libtpu: 0.0.40
codegen_flags: <defaults>
</compile_context>

<pallas_src>
import math

import jax
import jax.numpy as jnp
from jax.experimental import pallas as pl
from jax.experimental.pallas import tpu as pltpu

_LN2 = math.log(2.0)

_LANES = 128
_ACC_ROWS = 32           # accumulator sublanes: 4 f32 vregs of ILP for the fold
_MAX_BLOCK_ROWS = 8192   # (8192,128) f32 tile = 4 MiB; 2 inputs x 2 bufs = 16 MiB


def _num_tensorcores() -> int:
    """Best-effort count of TensorCores addressable by a single pallas_call."""
    try:
        kind = (jax.devices()[0].device_kind or "").lower()
    except Exception:
        return 1
    # v4 / v5p megacore and v7x expose 2 TensorCores per chip; v5e / v6e have 1.
    if any(tag in kind for tag in ("v4", "v5p", "7")):
        return 2
    return 1


def _make_logcosh_kernel(c, n_rows, block_rows, blocks_per_shard, need_mask):
    cf = float(c)
    folds = block_rows // _ACC_ROWS   # block_rows is a multiple of _ACC_ROWS

    def kernel(pred_ref, target_ref, out_ref):
        i = pl.program_id(1)

        @pl.when(i == 0)
        def _():
            out_ref[...] = jnp.zeros_like(out_ref)

        p = pred_ref[...].astype(jnp.float32)
        t = target_ref[...].astype(jnp.float32)
        # softplus(2*cd) - cd == |cd| + log1p(exp(-2|cd|)); the "- ln2" term is
        # deferred to a single scalar correction in the wrapper.
        a = cf * jnp.abs(p - t)
        g = a + jnp.log1p(jnp.exp(-2.0 * a))

        def fold(x):
            # (block_rows,128) -> (folds,32,128) sum over axis 0: independent
            # vreg adds into a (1,32,128) VMEM-resident output accumulator.
            return jnp.sum(x.reshape(folds, _ACC_ROWS, _LANES), axis=0)[None]

        if need_mask:
            shard = pl.program_id(0)
            blk = shard * blocks_per_shard + i
            remaining = n_rows - blk * block_rows

            @pl.when(remaining >= block_rows)       # interior tile: no mask
            def _():
                out_ref[...] += fold(g)

            @pl.when(remaining < block_rows)        # tail / clamped overrun tile
            def _():
                # jnp.where (not multiply-by-0) so uninitialized OOB VMEM rows
                # (possibly NaN/Inf) cannot leak into the accumulator.
                row_ids = jax.lax.broadcasted_iota(jnp.int32, g.shape, 0)
                out_ref[...] += fold(jnp.where(row_ids < remaining, g, 0.0))
        else:
            out_ref[...] += fold(g)

    return kernel


def logcosh_loss_pallas(pred, target, c: float = 4.0, reduction: str = "mean"):
    """Pallas TPU implementation of logcosh_loss. Always reduces with mean
    (matching the PyTorch source's `_reductions.get('reductions', torch.mean)`
    behaviour, which ignores `reduction`)."""
    assert pred.shape == target.shape
    n_elems = 1
    for d in pred.shape:
        n_elems *= d
    if n_elems == 0:
        # torch.mean of an empty tensor is NaN.
        return jnp.array(jnp.nan, dtype=jnp.float32)

    flat_p = pred.reshape(-1)
    flat_t = target.reshape(-1)
    lane_pad = (-n_elems) % _LANES
    if lane_pad:
        # Rare ragged path: pad <128 zeros (their ln2 contribution is corrected
        # below). The common path (n_elems % 128 == 0) is a free reshape with
        # zero extra HBM traffic.
        flat_p = jnp.pad(flat_p, (0, lane_pad))
        flat_t = jnp.pad(flat_t, (0, lane_pad))
    n_rows = (n_elems + lane_pad) // _LANES

    # block rows: multiple of _ACC_ROWS=32 (also covers bf16/int8 sublane packing)
    block_rows = min(_MAX_BLOCK_ROWS,
                     ((n_rows + _ACC_ROWS - 1) // _ACC_ROWS) * _ACC_ROWS)
    total_blocks = pl.cdiv(n_rows, block_rows)
    num_shards = max(1, min(_num_tensorcores(), total_blocks))
    blocks_per_shard = pl.cdiv(total_blocks, num_shards)
    need_mask = (n_rows % block_rows != 0) or (total_blocks % num_shards != 0)

    p2 = flat_p.reshape(n_rows, _LANES)
    t2 = flat_t.reshape(n_rows, _LANES)

    last_block = total_blocks - 1

    def in_map(shard, i):
        blk = shard * blocks_per_shard + i
        # clamp overrun block indices into range; their contribution is masked to 0
        return (jnp.minimum(blk, last_block), 0)

    # Explicit VMEM budget: 2 inputs x 2 pipeline buffers x tile, plus headroom.
    # Clamped to [32 MiB, 48 MiB]: above v5e's 16 MiB default scoped limit,
    # within v7x's 64 MiB physical VMEM.
    itemsize = jnp.dtype(pred.dtype).itemsize
    vmem_needed = 2 * 2 * block_rows * _LANES * max(itemsize, 4) + (4 << 20)
    vmem_limit = int(min(max(vmem_needed, 32 << 20), 48 << 20))

    partials = pl.pallas_call(
        _make_logcosh_kernel(c, n_rows, block_rows, blocks_per_shard, need_mask),
        out_shape=jax.ShapeDtypeStruct((num_shards, _ACC_ROWS, _LANES), jnp.float32),
        grid_spec=pltpu.PrefetchScalarGridSpec(
            num_scalar_prefetch=0,
            grid=(num_shards, blocks_per_shard),
            in_specs=[
                pl.BlockSpec((block_rows, _LANES), in_map),
                pl.BlockSpec((block_rows, _LANES), in_map),
            ],
            out_specs=pl.BlockSpec((1, _ACC_ROWS, _LANES),
                                   lambda shard, i: (shard, 0, 0)),
        ),
        compiler_params=pltpu.CompilerParams(
            dimension_semantics=("parallel", "arbitrary"),
            vmem_limit_bytes=vmem_limit,
        ),
    )(p2, t2)

    total = jnp.sum(partials, dtype=jnp.float32)
    # Deferred "- ln2": every non-masked element (real data + padded zeros,
    # i.e. n_rows*128 of them) contributed its value without the ln2 subtract;
    # padded zeros contribute exactly ln2, so one scalar correction suffices.
    return (total - _LN2 * float(n_rows * _LANES)) / (float(c) * float(n_elems))


def _logcosh_loss_ref(pred, target, c=4.0):
    cdelta = c * (pred.astype(jnp.float32) - target.astype(jnp.float32))
    num = jax.nn.softplus(2.0 * cdelta) - cdelta - _LN2
    return jnp.mean(num / c)


if __name__ == "__main__":
    key = jax.random.PRNGKey(0)
    k1, k2 = jax.random.split(key)
    # NCHW-style small shapes (batch=2, channels=4, spatial=16x16)
    pred = jax.random.normal(k1, (2, 4, 16, 16), dtype=jnp.float32)
    target = jax.random.normal(k2, (2, 4, 16, 16), dtype=jnp.float32)

    loss = logcosh_loss_pallas(pred, target, c=4.0, reduction="mean")
    loss = jax.block_until_ready(loss)

    ref = _logcosh_loss_ref(pred, target, c=4.0)
    assert jnp.allclose(loss, ref, rtol=1e-5, atol=1e-5), (loss, ref)

    print("KERNEL_OK")
</pallas_src>

<mosaic_0001>
module attributes {stable_mosaic.version = 11 : i64} {
  func.func @kernel(%arg0: i32, %arg1: i32, %arg2: memref<32x128xf32, #tpu.memory_space<vmem>>, %arg3: memref<32x128xf32, #tpu.memory_space<vmem>>, %arg4: memref<1x32x128xf32, #tpu.memory_space<vmem>>) attributes {dimension_semantics = [#tpu.dimension_semantics<parallel>, #tpu.dimension_semantics<arbitrary>], iteration_bounds = array<i64: 1, 1>, scalar_prefetch = 0 : i64, scratch_operands = 0 : i64, tpu.core_type = #tpu.core_type<tc>, window_params = [{transform_indices = @transform_0, window_bounds = array<i64: 32, 128>}, {transform_indices = @transform_1, window_bounds = array<i64: 32, 128>}, {transform_indices = @transform_2, window_bounds = array<i64: 1, 32, 128>}]} {
    %c0_i32 = arith.constant 0 : i32
    %0 = arith.cmpi eq, %arg1, %c0_i32 : i32
    %1 = arith.extui %0 : i1 to i32
    %c0_i32_0 = arith.constant 0 : i32
    %2 = arith.cmpi ne, %1, %c0_i32_0 : i32
    scf.if %2 {
      %cst_9 = arith.constant 0.000000e+00 : f32
      %24 = vector.broadcast %cst_9 : f32 to vector<1x32x128xf32>
      %c0_10 = arith.constant 0 : index
      %c0_11 = arith.constant 0 : index
      %c0_12 = arith.constant 0 : index
      %25 = vector.load %arg4[%c0_10, %c0_11, %c0_12] : memref<1x32x128xf32, #tpu.memory_space<vmem>>, vector<1x32x128xf32>
      tpu.vector_store %arg4[%c0_10, %c0_11, %c0_12], %24 {strides = array<i32>} : memref<1x32x128xf32, #tpu.memory_space<vmem>>, vector<1x32x128xf32>,
    } else {
    }
    %c0 = arith.constant 0 : index
    %c0_1 = arith.constant 0 : index
    %3 = vector.load %arg2[%c0, %c0_1] : memref<32x128xf32, #tpu.memory_space<vmem>>, vector<32x128xf32>
    %c0_2 = arith.constant 0 : index
    %c0_3 = arith.constant 0 : index
    %4 = vector.load %arg3[%c0_2, %c0_3] : memref<32x128xf32, #tpu.memory_space<vmem>>, vector<32x128xf32>
    %5 = arith.subf %3, %4 : vector<32x128xf32>
    %6 = math.absf %5 : vector<32x128xf32>
    %cst = arith.constant 4.000000e+00 : f32
    %7 = vector.broadcast %cst : f32 to vector<32x128xf32>
    %8 = arith.mulf %7, %6 : vector<32x128xf32>
    %cst_4 = arith.constant -2.000000e+00 : f32
    %9 = vector.broadcast %cst_4 : f32 to vector<32x128xf32>
    %10 = arith.mulf %9, %8 : vector<32x128xf32>
    %11 = math.exp %10 : vector<32x128xf32>
    %12 = math.log1p %11 : vector<32x128xf32>
    %13 = arith.addf %8, %12 : vector<32x128xf32>
    %c1_i32 = arith.constant 1 : i32
    %14 = arith.muli %arg0, %c1_i32 : i32
    %15 = arith.addi %14, %arg1 : i32
    %c32_i32 = arith.constant 32 : i32
    %16 = arith.muli %15, %c32_i32 : i32
    %c16_i32 = arith.constant 16 : i32
    %17 = arith.subi %c16_i32, %16 : i32
    %c32_i32_5 = arith.constant 32 : i32
    %18 = arith.cmpi sge, %17, %c32_i32_5 : i32
    %19 = arith.extui %18 : i1 to i32
    %c0_i32_6 = arith.constant 0 : i32
    %20 = arith.cmpi ne, %19, %c0_i32_6 : i32
    scf.if %20 {
      %c0_9 = arith.constant 0 : index
      %c0_10 = arith.constant 0 : index
      %c0_11 = arith.constant 0 : index
      %24 = vector.load %arg4[%c0_9, %c0_10, %c0_11] : memref<1x32x128xf32, #tpu.memory_space<vmem>>, vector<1x32x128xf32>
      %25 = vector.shape_cast %13 : vector<32x128xf32> to vector<1x32x128xf32>
      %cst_12 = arith.constant dense<0.000000e+00> : vector<32x128xf32>
      %26 = vector.multi_reduction <add>, %25, %cst_12 [0] : vector<1x32x128xf32> to vector<32x128xf32>
      %27 = vector.shape_cast %26 : vector<32x128xf32> to vector<1x32x128xf32>
      %28 = arith.addf %24, %27 : vector<1x32x128xf32>
      %c0_13 = arith.constant 0 : index
      %c0_14 = arith.constant 0 : index
      %c0_15 = arith.constant 0 : index
      %29 = vector.load %arg4[%c0_13, %c0_14, %c0_15] : memref<1x32x128xf32, #tpu.memory_space<vmem>>, vector<1x32x128xf32>
      tpu.vector_store %arg4[%c0_13, %c0_14, %c0_15], %28 {strides = array<i32>} : memref<1x32x128xf32, #tpu.memory_space<vmem>>, vector<1x32x128xf32>,
    } else {
    }
    %c32_i32_7 = arith.constant 32 : i32
    %21 = arith.cmpi slt, %17, %c32_i32_7 : i32
    %22 = arith.extui %21 : i1 to i32
    %c0_i32_8 = arith.constant 0 : i32
    %23 = arith.cmpi ne, %22, %c0_i32_8 : i32
    scf.if %23 {
      %24 = tpu.iota {dimensions = array<i32: 0>} : vector<32x128xi32>
      %c0_9 = arith.constant 0 : index
      %c0_10 = arith.constant 0 : index
      %c0_11 = arith.constant 0 : index
      %25 = vector.load %arg4[%c0_9, %c0_10, %c0_11] : memref<1x32x128xf32, #tpu.memory_space<vmem>>, vector<1x32x128xf32>
      %26 = vector.broadcast %17 : i32 to vector<32x128xi32>
      %27 = arith.cmpi slt, %24, %26 : vector<32x128xi32>
      %cst_12 = arith.constant 0.000000e+00 : f32
      %28 = vector.broadcast %cst_12 : f32 to vector<32x128xf32>
      %29 = arith.select %27, %13, %28 : vector<32x128xi1>, vector<32x128xf32>
      %30 = vector.shape_cast %29 : vector<32x128xf32> to vector<1x32x128xf32>
      %cst_13 = arith.constant dense<0.000000e+00> : vector<32x128xf32>
      %31 = vector.multi_reduction <add>, %30, %cst_13 [0] : vector<1x32x128xf32> to vector<32x128xf32>
      %32 = vector.shape_cast %31 : vector<32x128xf32> to vector<1x32x128xf32>
      %33 = arith.addf %25, %32 : vector<1x32x128xf32>
      %c0_14 = arith.constant 0 : index
      %c0_15 = arith.constant 0 : index
      %c0_16 = arith.constant 0 : index
      %34 = vector.load %arg4[%c0_14, %c0_15, %c0_16] : memref<1x32x128xf32, #tpu.memory_space<vmem>>, vector<1x32x128xf32>
      tpu.vector_store %arg4[%c0_14, %c0_15, %c0_16], %33 {strides = array<i32>} : memref<1x32x128xf32, #tpu.memory_space<vmem>>, vector<1x32x128xf32>,
    } else {
    }
    return
  }
  func.func @transform_0(%arg0: i32, %arg1: i32) -> (i32, i32) {
    %c1_i32 = arith.constant 1 : i32
    %0 = arith.muli %arg0, %c1_i32 : i32
    %1 = arith.addi %0, %arg1 : i32
    %c0_i32 = arith.constant 0 : i32
    %2 = arith.minsi %1, %c0_i32 : i32
    %c0_i32_0 = arith.constant 0 : i32
    %c0_i32_1 = arith.constant 0 : i32
    return %2, %c0_i32_0 : i32, i32
  }
  func.func @transform_1(%arg0: i32, %arg1: i32) -> (i32, i32) {
    %c1_i32 = arith.constant 1 : i32
    %0 = arith.muli %arg0, %c1_i32 : i32
    %1 = arith.addi %0, %arg1 : i32
    %c0_i32 = arith.constant 0 : i32
    %2 = arith.minsi %1, %c0_i32 : i32
    %c0_i32_0 = arith.constant 0 : i32
    %c0_i32_1 = arith.constant 0 : i32
    return %2, %c0_i32_0 : i32, i32
  }
  func.func @transform_2(%arg0: i32, %arg1: i32) -> (i32, i32, i32) {
    %c0_i32 = arith.constant 0 : i32
    %c0_i32_0 = arith.constant 0 : i32
    %c0_i32_1 = arith.constant 0 : i32
    return %arg0, %c0_i32, %c0_i32_0 : i32, i32, i32
  }
}

</mosaic_0001>

<llo_original>
// kernel: tpu_custom_call.1
$region0: #{tpu_custom_call.1}
  #allocation0 [shape = 'u32[]', space=smem, size = 0x4, offset = 0x4, fixed_abs, tag = 'smem constant byte address 0x4 - core index']
  #allocation1 [shape = 'u32[72,128]{1,0:T(1,128)}', space=vmem, size = 0x9000, scoped, tag = 'internal scratch']
  %s0 = inlined_call_operand.hbm [shape: f32[16,128], index: 0, kind: input, shape index: {}]
  %s1 = inlined_call_operand.hbm [shape: f32[16,128], index: 1, kind: input, shape index: {}]
  %s2 = inlined_call_operand.hbm [shape: f32[1,32,128], index: 2, kind: output, shape index: {}]
  %s3 = sld [smem:[#allocation0]]
  $region38: #{tpu_custom_call.1} parent=0
    _
  %s5 = ssub.s32 1, %s3
  %s6 = scalar_select 0, %s5, %s3
  $region1: #{tpu_custom_call.1} parent=0
    #allocation2 [shape = 'u8[16384]{0}', space=vmem, size = 0x4000, scoped, tag = 'input window, operand 0, single buffered']
    #allocation3 [shape = 's32[1]{0}', space=sflag, size = 0x4, scoped, tag = 'scoped memory for tpu_custom_call.1']
    #allocation4 [shape = 's32[1]{0}', space=sflag, size = 0x4, scoped, tag = 'scoped memory for tpu_custom_call.1']
    #allocation5 [shape = 'u8[16384]{0}', space=vmem, size = 0x4000, scoped, tag = 'input window, operand 1, single buffered']
    #allocation6 [shape = 's32[1]{0}', space=sflag, size = 0x4, scoped, tag = 'scoped memory for tpu_custom_call.1']
    #allocation7 [shape = 'u8[16384]{0}', space=vmem, size = 0x4000, scoped, tag = 'output window, operand 0, single buffered']
    %7 = vsyncpa [#allocation3], 0
    %8 = vsyncpa [#allocation6], 0
    %9 = vsyncpa [#allocation4], 0
    // Predicated region
    $region2: #{tpu_custom_call.1} parent=1 // pred_check
      _
    $region3: #{tpu_custom_call.1} parent=1 // pred_check_branch
      %11 = sbr.rel (0) target = $region5
    $region4: #{tpu_custom_call.1} parent=1 // pred_region
      %s12 = sadd.s32 0, 0
      %p13 = scmp.lt.s32.totalorder %s12, 0
      %s14 = scalar_select %p13, %s12, 0
      %s15 = smul.u32 4, %s14
      %s16 = ssub.s32 2, %s15
      %s17 = smul.u32 8, %s16
      %s18 = ssub.s32 32, %s17
      %s19 = sshll.u32 %s18, 4
      %20 = vsyncadd [#allocation3], %s19
      %p21 = scmp.ne.s32.totalorder 0, %s17
      %s22 = smul.addr %s15, 8
      %s23 = scalar_lea.hbm %s0, %s22
      %s24 = smul.u32 8, %s16
      %s25 = sshll.u32 %s23, 4
      %s26 = int_to_ptr.hbm [resolvable:$true] %s25
      %s27 = sshll.u32 [#allocation2], 4
      %s28 = int_to_ptr.vmem [resolvable:$true] %s27
      %s29 = sshll.u32 %s24, 4
      %33 = dma.hbm_to_vmem [thread:$0]  (%p21), %s26, %s29, %s28, [#allocation3], 128, 128, 8
    $region5: #{tpu_custom_call.1} parent=1 // pred_fallthru
      _
    // Predicated region
    $region6: #{tpu_custom_call.1} parent=1 // pred_check
      _
    $region7: #{tpu_custom_call.1} parent=1 // pred_check_branch
      %35 = sbr.rel (0) target = $region9
    $region8: #{tpu_custom_call.1} parent=1 // pred_region
      %s36 = sadd.s32 0, 0
      %p37 = scmp.lt.s32.totalorder %s36, 0
      %s38 = scalar_select %p37, %s36, 0
      %s39 = smul.u32 4, %s38
      %s40 = ssub.s32 2, %s39
      %s41 = smul.u32 8, %s40
      %s42 = ssub.s32 32, %s41
      %s43 = sshll.u32 %s42, 4
      %44 = vsyncadd [#allocation6], %s43
      %p45 = scmp.ne.s32.totalorder 0, %s41
      %s46 = smul.addr %s39, 8
      %s47 = scalar_lea.hbm %s1, %s46
      %s48 = smul.u32 8, %s40
      %s49 = sshll.u32 %s47, 4
      %s50 = int_to_ptr.hbm [resolvable:$true] %s49
      %s51 = sshll.u32 [#allocation5], 4
      %s52 = int_to_ptr.vmem [resolvable:$true] %s51
      %s53 = sshll.u32 %s48, 4
      %57 = dma.hbm_to_vmem [thread:$0]  (%p45), %s50, %s53, %s52, [#allocation6], 128, 128, 8
    $region9: #{tpu_custom_call.1} parent=1 // pred_fallthru
      _
    // Predicated region
    $region10: #{tpu_custom_call.1} parent=1 // pred_check
      _
    $region11: #{tpu_custom_call.1} parent=1 // pred_check_branch
      %59 = sbr.rel (0) target = $region13
    $region12: #{tpu_custom_call.1} parent=1 // pred_region
      %61 = dma.done [#allocation3], 512
    $region13: #{tpu_custom_call.1} parent=1 // pred_fallthru
      _
    // Predicated region
    $region14: #{tpu_custom_call.1} parent=1 // pred_check
      _
    $region15: #{tpu_custom_call.1} parent=1 // pred_check_branch
      %63 = sbr.rel (0) target = $region17
    $region16: #{tpu_custom_call.1} parent=1 // pred_region
      %65 = dma.done [#allocation6], 512
    $region17: #{tpu_custom_call.1} parent=1 // pred_fallthru
      _
    %s66 = sadd.s32 0, 0
    %p67 = scmp.lt.s32.totalorder %s66, 0
    %s68 = scalar_select %p67, %s66, 0
    %s69 = smul.u32 4, %s68
    %s70 = ssub.s32 2, %s69
    %s71 = smul.u32 8, %s70
    %s72 = sadd.s32 0, 0
    %p73 = scmp.lt.s32.totalorder %s72, 0
    %s74 = scalar_select %p73, %s72, 0
    %s75 = smul.u32 4, %s74
    %s76 = ssub.s32 2, %s75
    %s77 = smul.u32 8, %s76
    %p78 = scmp.eq.s32.totalorder 0, 0
    // Predicated region
    $region18: #{tpu_custom_call.1} parent=1 // pred_check
      %p79 = pneg %p78
    $region19: #{tpu_custom_call.1} parent=1 // pred_check_branch
      %81 = sbr.rel (%p79) target = $region21
    $region20: #{tpu_custom_call.1} parent=1 // pred_region
      %82 = vst [vmem:[#allocation7] sm:$0xff] 0.0
      %83 = vst [vmem:[#allocation7 + $0x8] sm:$0xff] 0.0
      %84 = vst [vmem:[#allocation7 + $0x10] sm:$0xff] 0.0
      %85 = vst [vmem:[#allocation7 + $0x18] sm:$0xff] 0.0
    $region21: #{tpu_custom_call.1} parent=1 // pred_fallthru
      _
    %v86 = vld [vmem:[#allocation2] sm:$0xff]
    %v87 = vld [vmem:[#allocation2 + $0x8] sm:$0xff]
    %v88 = vld [vmem:[#allocation2 + $0x10] sm:$0xff]
    %v89 = vld [vmem:[#allocation2 + $0x18] sm:$0xff]
    %v90 = vld [vmem:[#allocation5] sm:$0xff]
    %v91 = vld [vmem:[#allocation5 + $0x8] sm:$0xff]
    %v92 = vld [vmem:[#allocation5 + $0x10] sm:$0xff]
    %v93 = vld [vmem:[#allocation5 + $0x18] sm:$0xff]
    %v94 = vsub.f32 %v86, %v90
    %v95 = vsub.f32 %v87, %v91
    %v96 = vsub.f32 %v88, %v92
    %v97 = vsub.f32 %v89, %v93
    %v98 = vand.u32 2147483647, %v94
    %v99 = vand.u32 2147483647, %v95
    %v100 = vand.u32 2147483647, %v96
    %v101 = vand.u32 2147483647, %v97
    %v102 = vmul.f32 %v98, 4.0
    %v103 = vmul.f32 %v99, 4.0
    %v104 = vmul.f32 %v100, 4.0
    %v105 = vmul.f32 %v101, 4.0
    %v106 = vmul.f32 %v102, -2.0
    %v107 = vmul.f32 %v103, -2.0
    %v108 = vmul.f32 %v104, -2.0
    %v109 = vmul.f32 %v105, -2.0
    %v110 = vmul.f32 %v106, 1.442695
    %v111 = vpow.pop %v110
    %v112 = vmul.f32 %v107, 1.442695
    %v113 = vpow.pop %v112
    %v114 = vmul.f32 %v108, 1.442695
    %v115 = vpow.pop %v114
    %v116 = vmul.f32 %v109, 1.442695
    %v117 = vpow.pop %v116
    %v118 = vadd.f32 %v111, 1.0
    %v119 = vlog2.pop %v118
    %v120 = vmul.f32 %v119, 0.6931472
    %v121 = vmul.f32 -0.5, %v111
    %v122 = vadd.f32 %v121, 1.0
    %v123 = vmul.f32 %v122, %v111
    %v124 = vand.u32 2147483647, %v111
    %vm125 = vcmp.lt.f32.partialorder %v124, 0.0004427343
    %v126 = vsel %vm125, %v123, %v120
    %v127 = vadd.f32 %v113, 1.0
    %v128 = vlog2.pop %v127
    %v129 = vmul.f32 %v128, 0.6931472
    %v130 = vmul.f32 -0.5, %v113
    %v131 = vadd.f32 %v130, 1.0
    %v132 = vmul.f32 %v131, %v113
    %v133 = vand.u32 2147483647, %v113
    %vm134 = vcmp.lt.f32.partialorder %v133, 0.0004427343
    %v135 = vsel %vm134, %v132, %v129
    %v136 = vadd.f32 %v115, 1.0
    %v137 = vlog2.pop %v136
    %v138 = vmul.f32 %v137, 0.6931472
    %v139 = vmul.f32 -0.5, %v115
    %v140 = vadd.f32 %v139, 1.0
    %v141 = vmul.f32 %v140, %v115
    %v142 = vand.u32 2147483647, %v115
    %vm143 = vcmp.lt.f32.partialorder %v142, 0.0004427343
    %v144 = vsel %vm143, %v141, %v138
    %v145 = vadd.f32 %v117, 1.0
    %v146 = vlog2.pop %v145
    %v147 = vmul.f32 %v146, 0.6931472
    %v148 = vmul.f32 -0.5, %v117
    %v149 = vadd.f32 %v148, 1.0
    %v150 = vmul.f32 %v149, %v117
    %v151 = vand.u32 2147483647, %v117
    %vm152 = vcmp.lt.f32.partialorder %v151, 0.0004427343
    %v153 = vsel %vm152, %v150, %v147
    %v154 = vadd.f32 %v102, %v126
    %v155 = vadd.f32 %v103, %v135
    %v156 = vadd.f32 %v104, %v144
    %v157 = vadd.f32 %v105, %v153
    %s158 = sadd.s32 0, 0
    %s159 = smul.u32 %s158, 32
    %s160 = ssub.s32 16, %s159
    %p161 = scmp.ge.s32.totalorder %s160, 32
    // Predicated region
    $region22: #{tpu_custom_call.1} parent=1 // pred_check
      %p162 = pneg %p161
    $region23: #{tpu_custom_call.1} parent=1 // pred_check_branch
      %164 = sbr.rel (%p162) target = $region25
    $region24: #{tpu_custom_call.1} parent=1 // pred_region
      %v165 = vld [vmem:[#allocation7] sm:$0xff]
      %v166 = vld [vmem:[#allocation7 + $0x8] sm:$0xff]
      %v167 = vld [vmem:[#allocation7 + $0x10] sm:$0xff]
      %v168 = vld [vmem:[#allocation7 + $0x18] sm:$0xff]
      %v169 = vadd.f32 %v154, 0.0
      %v170 = vadd.f32 %v155, 0.0
      %v171 = vadd.f32 %v156, 0.0
      %v172 = vadd.f32 %v157, 0.0
      %v173 = vadd.f32 %v165, %v169
      %v174 = vadd.f32 %v166, %v170
      %v175 = vadd.f32 %v167, %v171
      %v176 = vadd.f32 %v168, %v172
      %177 = vst [vmem:[#allocation7] sm:$0xff] %v173
      %178 = vst [vmem:[#allocation7 + $0x8] sm:$0xff] %v174
      %179 = vst [vmem:[#allocation7 + $0x10] sm:$0xff] %v175
      %180 = vst [vmem:[#allocation7 + $0x18] sm:$0xff] %v176
    $region25: #{tpu_custom_call.1} parent=1 // pred_fallthru
      _
    %p181 = scmp.lt.s32.totalorder %s160, 32
    // Predicated region
    $region26: #{tpu_custom_call.1} parent=1 // pred_check
      %p182 = pneg %p181
    $region27: #{tpu_custom_call.1} parent=1 // pred_check_branch
      %184 = sbr.rel (%p182) target = $region29
    $region28: #{tpu_custom_call.1} parent=1 // pred_region
      %v185 = vlaneseq
      %v186 = vshrl.u32 %v185, 7
      %v187 = vadd.s32 %v186, 8
      %v188 = vadd.s32 %v186, 16
      %v189 = vadd.s32 %v186, 24
      %v190 = vld [vmem:[#allocation7] sm:$0xff]
      %v191 = vld [vmem:[#allocation7 + $0x8] sm:$0xff]
      %v192 = vld [vmem:[#allocation7 + $0x10] sm:$0xff]
      %v193 = vld [vmem:[#allocation7 + $0x18] sm:$0xff]
      %v194 = vstv %s160
      %vm195 = vcmp.lt.s32.totalorder %v186, %v194
      %vm196 = vcmp.lt.s32.totalorder %v187, %v194
      %vm197 = vcmp.lt.s32.totalorder %v188, %v194
      %vm198 = vcmp.lt.s32.totalorder %v189, %v194
      %v199 = vsel %vm195, %v154, 0.0
      %v200 = vsel %vm196, %v155, 0.0
      %v201 = vsel %vm197, %v156, 0.0
      %v202 = vsel %vm198, %v157, 0.0
      %v203 = vadd.f32 %v199, 0.0
      %v204 = vadd.f32 %v200, 0.0
      %v205 = vadd.f32 %v201, 0.0
      %v206 = vadd.f32 %v202, 0.0
      %v207 = vadd.f32 %v190, %v203
      %v208 = vadd.f32 %v191, %v204
      %v209 = vadd.f32 %v192, %v205
      %v210 = vadd.f32 %v193, %v206
      %211 = vst [vmem:[#allocation7] sm:$0xff] %v207
      %212 = vst [vmem:[#allocation7 + $0x8] sm:$0xff] %v208
      %213 = vst [vmem:[#allocation7 + $0x10] sm:$0xff] %v209
      %214 = vst [vmem:[#allocation7 + $0x18] sm:$0xff] %v210
    $region29: #{tpu_custom_call.1} parent=1 // pred_fallthru
      _
    // Predicated region
    $region30: #{tpu_custom_call.1} parent=1 // pred_check
      _
    $region31: #{tpu_custom_call.1} parent=1 // pred_check_branch
      %216 = sbr.rel (0) target = $region33
    $region32: #{tpu_custom_call.1} parent=1 // pred_region
      %218 = vsyncadd [#allocation4], 0
      %s219 = sshll.u32 [#allocation7], 4
      %s220 = int_to_ptr.vmem [resolvable:$true] %s219
      %s221 = sshll.u32 %s2, 4
      %s222 = int_to_ptr.hbm [resolvable:$true] %s221
      %227 = dma.vmem_to_hbm [thread:$0]  %s220, 512, %s222, [#allocation4], 128, 128, 8
    $region33: #{tpu_custom_call.1} parent=1 // pred_fallthru
      _
    // Predicated region
    $region34: #{tpu_custom_call.1} parent=1 // pred_check
      _
    $region35: #{tpu_custom_call.1} parent=1 // pred_check_branch
      %229 = sbr.rel (0) target = $region37
    $region36: #{tpu_custom_call.1} parent=1 // pred_region
      %231 = dma.done [#allocation4], 512
    $region37: #{tpu_custom_call.1} parent=1 // pred_fallthru
      _
    %232 = vsyncpa [#allocation3], 1
    %233 = vsyncpa [#allocation6], 1
    %234 = vsyncpa [#allocation4], 1

</llo_original>
